<compile_context>
chip_gen: v7x
topology: tpu7x:2x2x1
jax: 0.10.0
libtpu: 0.0.40
codegen_flags: <defaults>
</compile_context>

<pallas_src>
import functools

import numpy as np
import jax
import jax.numpy as jnp
from jax.experimental import pallas as pl
from jax.experimental.pallas import tpu as pltpu


def channel_attention_kernel(x_ref, p_ref, out_ref, *, H, C, L):
    # x_ref:  (T, C, L)  input dtype   batch tile
    # p_ref:  (2H+2, C)  f32           packed params: [w1 (H,C); b1 (1,H pad); w2.T (H,C); b2 (1,C)]
    # out_ref:(T, C*L)   input dtype   lane-dense output tile
    x = x_ref[...].astype(jnp.float32)                  # (T, C, L), math in f32

    p = p_ref[...]                                      # (2H+2, C) f32
    w1 = p[0:H, :]                                      # (H, C)   fc1 weight (torch out x in)
    b1 = p[H:H + 1, :H]                                 # (1, H)   fc1 bias
    w2t = p[H + 1:2 * H + 1, :]                         # (H, C)   fc2 weight, transposed
    b2 = p[2 * H + 1:2 * H + 2, :]                      # (1, C)   fc2 bias

    # Global average pool over length (lane-axis reduction).
    pooled = jnp.mean(x, axis=-1)                       # (T, C)

    # fc1 + ReLU.  C=16, H=4 are tiny: broadcast-multiply + lane reduce on the
    # VPU/XLU; an MXU matmul would be >99% padding.
    h = jnp.sum(pooled[:, None, :] * w1[None, :, :], axis=-1) + b1   # (T, H)
    h = jnp.maximum(h, 0.0)

    # fc2: a[n, c] = sum_h h[n, h] * w2[c, h] = sum_h h[n, h] * w2t[h, c].
    a = jnp.sum(h[:, :, None] * w2t[None, :, :], axis=1) + b2        # (T, C)

    # Sigmoid gate (EUP) and per-channel scaling of x.
    gate = jax.nn.sigmoid(a)                            # (T, C)
    y = x * gate[:, :, None]                            # (T, C, L)

    # Lane-dense store: flatten (C, L) -> C*L (multiple of 128 lanes).
    out_ref[...] = y.reshape(out_ref.shape).astype(out_ref.dtype)


def _pick_tile_n(N, C, L, itemsize, target_bytes=1 << 20):
    """Batch rows per grid step, targeting ~1 MiB input blocks."""
    t = max(1, target_bytes // (C * L * itemsize))
    if t >= N:
        return N                       # single block covering the whole batch
    t = max(8, (t // 8) * 8)           # keep sublane dim of the 2-D out block 8-aligned
    return min(t, N)


def channel_attention_forward(x, w1, b1, w2, b2):
    N, C, L = x.shape
    H = w1.shape[0]
    dtype = x.dtype
    itemsize = jnp.dtype(dtype).itemsize

    # Pack the four tiny param tensors into one f32 block (single broadcast DMA).
    params = jnp.zeros((2 * H + 2, C), jnp.float32)
    params = params.at[0:H, :].set(w1.astype(jnp.float32))
    params = params.at[H, :H].set(b1.astype(jnp.float32))
    params = params.at[H + 1:2 * H + 1, :].set(w2.T.astype(jnp.float32))
    params = params.at[2 * H + 1, :].set(b2.astype(jnp.float32))

    tile_n = _pick_tile_n(N, C, L, itemsize)
    grid = (pl.cdiv(N, tile_n),)

    kernel = functools.partial(channel_attention_kernel, H=H, C=C, L=L)

    # Cost hint sized to the actual I/O dtype (memory-bound read-x/write-x pass).
    flops = 2 * N * C * L + 4 * N * C * H
    bytes_accessed = 2 * N * C * L * itemsize + int(params.size) * 4
    cost = pl.CostEstimate(flops=flops, transcendentals=N * C,
                           bytes_accessed=bytes_accessed)

    out_flat = pl.pallas_call(
        kernel,
        out_shape=jax.ShapeDtypeStruct((N, C * L), dtype),   # lane-dense layout
        grid=grid,
        in_specs=[
            pl.BlockSpec((tile_n, C, L), lambda n: (n, 0, 0)),     # batch tile of x
            pl.BlockSpec((2 * H + 2, C), lambda n: (0, 0)),        # packed params (broadcast)
        ],
        out_specs=pl.BlockSpec((tile_n, C * L), lambda n: (n, 0)),
        compiler_params=pltpu.CompilerParams(
            dimension_semantics=("parallel",)),                    # batch tiles across TCs
        cost_estimate=cost,
    )(x, params)

    # Free metadata reshape back to the module's (N, C, L) output layout.
    return out_flat.reshape(N, C, L)


if __name__ == "__main__":
    # Shapes consistent with the module: x is (batch, in_channels, length),
    # reduction=4 -> hidden = in_channels // 4.
    N, C, L = 2, 16, 32
    RED = 4
    H = C // RED

    key = jax.random.PRNGKey(0)
    kx, kw1, kb1, kw2, kb2 = jax.random.split(key, 5)

    x = jax.random.normal(kx, (N, C, L), dtype=jnp.float32)
    w1 = (0.2 * jax.random.normal(kw1, (H, C))).astype(jnp.float32)   # torch Linear: (out, in)
    b1 = (0.1 * jax.random.normal(kb1, (H,))).astype(jnp.float32)
    w2 = (0.2 * jax.random.normal(kw2, (C, H))).astype(jnp.float32)
    b2 = (0.1 * jax.random.normal(kb2, (C,))).astype(jnp.float32)

    out = channel_attention_forward(x, w1, b1, w2, b2)
    out = jax.block_until_ready(out)

    # Pure-JAX reference of the same forward pass.
    pooled_ref = jnp.mean(x, axis=-1)                                  # (N, C)
    h_ref = jnp.maximum(pooled_ref @ w1.T + b1, 0.0)                   # (N, H)
    att_ref = jax.nn.sigmoid(h_ref @ w2.T + b2)                        # (N, C)
    ref = x * att_ref[:, :, None]                                      # (N, C, L)

    assert out.shape == (N, C, L)
    assert out.dtype == x.dtype
    assert np.allclose(np.asarray(out), np.asarray(ref), rtol=1e-5, atol=1e-5)
    print("KERNEL_OK")
</pallas_src>

<mosaic_0001>
module attributes {stable_mosaic.version = 11 : i64} {
  func.func @channel_attention_kernel(%arg0: i32, %arg1: memref<2x16x32xf32, #tpu.memory_space<vmem>>, %arg2: memref<10x16xf32, #tpu.memory_space<vmem>>, %arg3: memref<2x512xf32, #tpu.memory_space<vmem>>) attributes {dimension_semantics = [#tpu.dimension_semantics<parallel>], iteration_bounds = array<i64: 1>, scalar_prefetch = 0 : i64, scratch_operands = 0 : i64, tpu.core_type = #tpu.core_type<tc>, window_params = [{transform_indices = @transform_0, window_bounds = array<i64: 2, 16, 32>}, {pipeline_mode = #tpu.pipeline_mode<synchronous>, transform_indices = @transform_1, window_bounds = array<i64: 10, 16>}, {transform_indices = @transform_2, window_bounds = array<i64: 2, 512>}]} {
    %c0 = arith.constant 0 : index
    %c0_0 = arith.constant 0 : index
    %c0_1 = arith.constant 0 : index
    %0 = vector.load %arg1[%c0, %c0_0, %c0_1] : memref<2x16x32xf32, #tpu.memory_space<vmem>>, vector<2x16x32xf32>
    %c0_2 = arith.constant 0 : index
    %c0_3 = arith.constant 0 : index
    %1 = vector.load %arg2[%c0_2, %c0_3] : memref<10x16xf32, #tpu.memory_space<vmem>>, vector<10x16xf32>
    %2 = vector.extract_strided_slice %1 {offsets = [0, 0], sizes = [4, 16], strides = [1, 1]} : vector<10x16xf32> to vector<4x16xf32>
    %3 = vector.extract_strided_slice %1 {offsets = [4, 0], sizes = [1, 4], strides = [1, 1]} : vector<10x16xf32> to vector<1x4xf32>
    %4 = vector.extract_strided_slice %1 {offsets = [5, 0], sizes = [4, 16], strides = [1, 1]} : vector<10x16xf32> to vector<4x16xf32>
    %5 = vector.extract_strided_slice %1 {offsets = [9, 0], sizes = [1, 16], strides = [1, 1]} : vector<10x16xf32> to vector<1x16xf32>
    %cst = arith.constant dense<0.000000e+00> : vector<2x16xf32>
    %6 = vector.multi_reduction <add>, %0, %cst [2] : vector<2x16x32xf32> to vector<2x16xf32>
    %cst_4 = arith.constant 3.200000e+01 : f32
    %7 = vector.broadcast %cst_4 : f32 to vector<2x16xf32>
    %8 = arith.divf %6, %7 : vector<2x16xf32>
    %9 = vector.shape_cast %8 : vector<2x16xf32> to vector<2x1x16xf32>
    %10 = vector.shape_cast %2 : vector<4x16xf32> to vector<1x4x16xf32>
    %11 = vector.broadcast %9 : vector<2x1x16xf32> to vector<2x4x16xf32>
    %12 = vector.broadcast %10 : vector<1x4x16xf32> to vector<2x4x16xf32>
    %13 = arith.mulf %11, %12 : vector<2x4x16xf32>
    %cst_5 = arith.constant dense<0.000000e+00> : vector<2x4xf32>
    %14 = vector.multi_reduction <add>, %13, %cst_5 [2] : vector<2x4x16xf32> to vector<2x4xf32>
    %15 = vector.broadcast %3 : vector<1x4xf32> to vector<2x4xf32>
    %16 = arith.addf %14, %15 : vector<2x4xf32>
    %cst_6 = arith.constant 0.000000e+00 : f32
    %17 = vector.broadcast %cst_6 : f32 to vector<2x4xf32>
    %18 = arith.maximumf %16, %17 : vector<2x4xf32>
    %19 = vector.shape_cast %18 : vector<2x4xf32> to vector<2x4x1xf32>
    %20 = vector.shape_cast %4 : vector<4x16xf32> to vector<1x4x16xf32>
    %21 = vector.broadcast %19 : vector<2x4x1xf32> to vector<2x4x16xf32>
    %22 = vector.broadcast %20 : vector<1x4x16xf32> to vector<2x4x16xf32>
    %23 = arith.mulf %21, %22 : vector<2x4x16xf32>
    %cst_7 = arith.constant dense<0.000000e+00> : vector<2x16xf32>
    %24 = vector.multi_reduction <add>, %23, %cst_7 [1] : vector<2x4x16xf32> to vector<2x16xf32>
    %25 = vector.broadcast %5 : vector<1x16xf32> to vector<2x16xf32>
    %26 = arith.addf %24, %25 : vector<2x16xf32>
    %27 = arith.negf %26 : vector<2x16xf32>
    %28 = math.exp %27 : vector<2x16xf32>
    %cst_8 = arith.constant 1.000000e+00 : f32
    %29 = vector.broadcast %cst_8 : f32 to vector<2x16xf32>
    %30 = arith.addf %29, %28 : vector<2x16xf32>
    %31 = arith.divf %29, %30 : vector<2x16xf32>
    %32 = vector.shape_cast %31 : vector<2x16xf32> to vector<2x16x1xf32>
    %33 = vector.broadcast %32 : vector<2x16x1xf32> to vector<2x16x32xf32>
    %34 = arith.mulf %0, %33 : vector<2x16x32xf32>
    %35 = vector.shape_cast %34 : vector<2x16x32xf32> to vector<2x512xf32>
    %c0_9 = arith.constant 0 : index
    %c0_10 = arith.constant 0 : index
    %36 = vector.load %arg3[%c0_9, %c0_10] : memref<2x512xf32, #tpu.memory_space<vmem>>, vector<2x512xf32>
    tpu.vector_store %arg3[%c0_9, %c0_10], %35 {strides = array<i32>} : memref<2x512xf32, #tpu.memory_space<vmem>>, vector<2x512xf32>,
    return
  }
  func.func @transform_0(%arg0: i32) -> (i32, i32, i32) {
    %c0_i32 = arith.constant 0 : i32
    %c0_i32_0 = arith.constant 0 : i32
    %c0_i32_1 = arith.constant 0 : i32
    return %arg0, %c0_i32, %c0_i32_0 : i32, i32, i32
  }
  func.func @transform_1(%arg0: i32) -> (i32, i32) {
    %c0_i32 = arith.constant 0 : i32
    %c0_i32_0 = arith.constant 0 : i32
    %c0_i32_1 = arith.constant 0 : i32
    return %c0_i32, %c0_i32_0 : i32, i32
  }
  func.func @transform_2(%arg0: i32) -> (i32, i32) {
    %c0_i32 = arith.constant 0 : i32
    %c0_i32_0 = arith.constant 0 : i32
    return %arg0, %c0_i32 : i32, i32
  }
}

</mosaic_0001>

<llo_original>
// kernel: tpu_custom_call.1
$region0: #{tpu_custom_call.1}
  #allocation0 [shape = 'u32[]', space=smem, size = 0x4, offset = 0x4, fixed_abs, tag = 'smem constant byte address 0x4 - core index']
  #allocation1 [shape = 'u32[144,128]{1,0:T(1,128)}', space=vmem, size = 0x12000, scoped, tag = 'internal scratch']
  %s0 = inlined_call_operand.hbm [shape: f32[2,16,32], index: 0, kind: input, shape index: {}]
  %s1 = inlined_call_operand.hbm [shape: f32[10,16], index: 1, kind: input, shape index: {}]
  %s2 = inlined_call_operand.hbm [shape: f32[2,512], index: 2, kind: output, shape index: {}]
  %s3 = sld [smem:[#allocation0]]
  $region26: #{tpu_custom_call.1} parent=0
    _
  %s5 = ssub.s32 1, %s3
  %s6 = scalar_select 0, %s5, %s3
  $region1: #{tpu_custom_call.1} parent=0
    #allocation2 [shape = 'u8[16384]{0}', space=vmem, size = 0x4000, scoped, tag = 'input window, operand 0, single buffered']
    #allocation3 [shape = 's32[1]{0}', space=sflag, size = 0x4, scoped, tag = 'scoped memory for tpu_custom_call.1']
    #allocation4 [shape = 's32[1]{0}', space=sflag, size = 0x4, scoped, tag = 'scoped memory for tpu_custom_call.1']
    #allocation5 [shape = 'u8[8192]{0}', space=vmem, size = 0x2000, scoped, tag = 'input window, operand 1, single buffered']
    #allocation6 [shape = 's32[1]{0}', space=sflag, size = 0x4, scoped, tag = 'scoped memory for tpu_custom_call.1']
    #allocation7 [shape = 'u8[4096]{0}', space=vmem, size = 0x1000, scoped, tag = 'output window, operand 0, single buffered']
    %7 = vsyncpa [#allocation3], 0
    %8 = vsyncpa [#allocation6], 0
    %9 = vsyncpa [#allocation4], 0
    // Predicated region
    $region2: #{tpu_custom_call.1} parent=1 // pred_check
      _
    $region3: #{tpu_custom_call.1} parent=1 // pred_check_branch
      %11 = sbr.rel (0) target = $region5
    $region4: #{tpu_custom_call.1} parent=1 // pred_region
      %s13 = ssub.s32 512, 512
      %14 = vsyncadd [#allocation3], %s13
      %s15 = sshll.u32 [#allocation2], 4
      %s16 = int_to_ptr.vmem [resolvable:$true] %s15
      %21 = dma.hbm_to_vmem [thread:$0]  %s0, 512, %s16, [#allocation3], 128, 128, 8
    $region5: #{tpu_custom_call.1} parent=1 // pred_fallthru
      _
    // Predicated region
    $region6: #{tpu_custom_call.1} parent=1 // pred_check
      _
    $region7: #{tpu_custom_call.1} parent=1 // pred_check_branch
      %23 = sbr.rel (0) target = $region9
    $region8: #{tpu_custom_call.1} parent=1 // pred_region
      %s25 = ssub.s32 256, 256
      %26 = vsyncadd [#allocation6], %s25
      %s27 = sshll.u32 [#allocation5], 4
      %s28 = int_to_ptr.vmem [resolvable:$true] %s27
      %33 = dma.hbm_to_vmem [thread:$0]  %s1, 256, %s28, [#allocation6], 128, 128, 8
    $region9: #{tpu_custom_call.1} parent=1 // pred_fallthru
      _
    // Predicated region
    $region10: #{tpu_custom_call.1} parent=1 // pred_check
      _
    $region11: #{tpu_custom_call.1} parent=1 // pred_check_branch
      %35 = sbr.rel (0) target = $region13
    $region12: #{tpu_custom_call.1} parent=1 // pred_region
      %36 = dma.done [#allocation3], 512
    $region13: #{tpu_custom_call.1} parent=1 // pred_fallthru
      _
    // Predicated region
    $region14: #{tpu_custom_call.1} parent=1 // pred_check
      _
    $region15: #{tpu_custom_call.1} parent=1 // pred_check_branch
      %38 = sbr.rel (0) target = $region17
    $region16: #{tpu_custom_call.1} parent=1 // pred_region
      %39 = dma.done [#allocation6], 256
    $region17: #{tpu_custom_call.1} parent=1 // pred_fallthru
      _
    %v40 = vld [vmem:[#allocation2] sm:$0xff]
    %v41 = vld [vmem:[#allocation2 + $0x8] sm:$0xff]
    %v42 = vld [vmem:[#allocation2 + $0x10] sm:$0xff]
    %v43 = vld [vmem:[#allocation2 + $0x18] sm:$0xff]
    %v44 = vld [vmem:[#allocation5] sm:$0xff]
    %v45 = vld [vmem:[#allocation5 + $0x8] sm:$0x3]
    %vm46 = vcmask 261120
    %v47 = vsel %vm46, %v40, 0.0
    %48 = vadd.xlane.f32.xlu0 %v47
    %v49 = vpop.xlane.xlu0 %48
    %v50 = vsel %vm46, %v41, 0.0
    %51 = vadd.xlane.f32.xlu0 %v50
    %v52 = vpop.xlane.xlu0 %51
    %v53 = vsel %vm46, %v42, 0.0
    %54 = vadd.xlane.f32.xlu0 %v53
    %v55 = vpop.xlane.xlu0 %54
    %v56 = vsel %vm46, %v43, 0.0
    %57 = vadd.xlane.f32.xlu0 %v56
    %v58 = vpop.xlane.xlu0 %57
    %v59 = vrcp.pop 32.0
    %v60 = vmul.f32 %v49, %v59
    %v61 = vmul.f32 %v52, %v59
    %v62 = vmul.f32 %v55, %v59
    %v63 = vmul.f32 %v58, %v59
    %v65 = vlaneseq
    %v66 = vshrl.u32 %v65, 7
    %v67 = vsub.s32 0, %v66
    %v68 = vrot.slane %v44, %v67
    %70 = vbcast.lane.b32.xlu0 %v68, 256
    %v71 = vpop.permute.xlu0 %70
    %s73 = sor.u32 256, 8
    %74 = vbcast.lane.b32.xlu0 %v68, %s73
    %v75 = vpop.permute.xlu0 %74
    %v76 = vlaneseq
    %v77 = vshrl.u32 %v76, 7
    %v78 = vsub.s32 1, %v77
    %v79 = vrot.slane %v44, %v78
    %81 = vbcast.lane.b32.xlu0 %v79, 256
    %v82 = vpop.permute.xlu0 %81
    %s84 = sor.u32 256, 8
    %85 = vbcast.lane.b32.xlu0 %v79, %s84
    %v86 = vpop.permute.xlu0 %85
    %v87 = vlaneseq
    %v88 = vshrl.u32 %v87, 7
    %v89 = vsub.s32 2, %v88
    %v90 = vrot.slane %v44, %v89
    %92 = vbcast.lane.b32.xlu0 %v90, 256
    %v93 = vpop.permute.xlu0 %92
    %s95 = sor.u32 256, 8
    %96 = vbcast.lane.b32.xlu0 %v90, %s95
    %v97 = vpop.permute.xlu0 %96
    %v98 = vlaneseq
    %v99 = vshrl.u32 %v98, 7
    %v100 = vsub.s32 3, %v99
    %v101 = vrot.slane %v44, %v100
    %103 = vbcast.lane.b32.xlu0 %v101, 256
    %v104 = vpop.permute.xlu0 %103
    %s106 = sor.u32 256, 8
    %107 = vbcast.lane.b32.xlu0 %v101, %s106
    %v108 = vpop.permute.xlu0 %107
    %v117 = vmul.f32 %v60, %v71
    %v118 = vmul.f32 %v61, %v75
    %v119 = vmul.f32 %v60, %v82
    %v120 = vmul.f32 %v61, %v86
    %v121 = vmul.f32 %v60, %v93
    %v122 = vmul.f32 %v61, %v97
    %v123 = vmul.f32 %v60, %v104
    %v124 = vmul.f32 %v61, %v108
    %v125 = vmul.f32 %v62, %v71
    %v126 = vmul.f32 %v63, %v75
    %v127 = vmul.f32 %v62, %v82
    %v128 = vmul.f32 %v63, %v86
    %v129 = vmul.f32 %v62, %v93
    %v130 = vmul.f32 %v63, %v97
    %v131 = vmul.f32 %v62, %v104
    %v132 = vmul.f32 %v63, %v108
    %149 = vset.pattern.permute.xlu0 0
    %150 = vperm.xlu0 %149, %v117
    %v151 = vpop.permute.xlu0 %150
    %152 = vset.pattern.permute.xlu0 0
    %153 = vperm.xlu0 %152, %v118
    %v154 = vpop.permute.xlu0 %153
    %155 = vset.pattern.permute.xlu0 0
    %156 = vperm.xlu0 %155, %v119
    %v157 = vpop.permute.xlu0 %156
    %158 = vset.pattern.permute.xlu0 0
    %159 = vperm.xlu0 %158, %v120
    %v160 = vpop.permute.xlu0 %159
    %161 = vset.pattern.permute.xlu0 0
    %162 = vperm.xlu0 %161, %v121
    %v163 = vpop.permute.xlu0 %162
    %164 = vset.pattern.permute.xlu0 0
    %165 = vperm.xlu0 %164, %v122
    %v166 = vpop.permute.xlu0 %165
    %167 = vset.pattern.permute.xlu0 0
    %168 = vperm.xlu0 %167, %v123
    %v169 = vpop.permute.xlu0 %168
    %170 = vset.pattern.permute.xlu0 0
    %171 = vperm.xlu0 %170, %v124
    %v172 = vpop.permute.xlu0 %171
    %173 = vset.pattern.permute.xlu0 0
    %174 = vperm.xlu0 %173, %v125
    %v175 = vpop.permute.xlu0 %174
    %176 = vset.pattern.permute.xlu0 0
    %177 = vperm.xlu0 %176, %v126
    %v178 = vpop.permute.xlu0 %177
    %179 = vset.pattern.permute.xlu0 0
    %180 = vperm.xlu0 %179, %v127
    %v181 = vpop.permute.xlu0 %180
    %182 = vset.pattern.permute.xlu0 0
    %183 = vperm.xlu0 %182, %v128
    %v184 = vpop.permute.xlu0 %183
    %185 = vset.pattern.permute.xlu0 0
    %186 = vperm.xlu0 %185, %v129
    %v187 = vpop.permute.xlu0 %186
    %188 = vset.pattern.permute.xlu0 0
    %189 = vperm.xlu0 %188, %v130
    %v190 = vpop.permute.xlu0 %189
    %191 = vset.pattern.permute.xlu0 0
    %192 = vperm.xlu0 %191, %v131
    %v193 = vpop.permute.xlu0 %192
    %194 = vset.pattern.permute.xlu0 0
    %195 = vperm.xlu0 %194, %v132
    %v196 = vpop.permute.xlu0 %195
    %v197 = vlaneseq
    %v198 = vand.u32 %v197, 127
    %v199 = vlaneseq
    %v200 = vshrl.u32 %v199, 7
    %v201 = vsub.s32 %v198, %v200
    %v202 = vrot.slane %v151, %v201
    %v203 = vadd.s32 %v198, 4294967288
    %v204 = vlaneseq
    %v205 = vshrl.u32 %v204, 7
    %v206 = vsub.s32 %v203, %v205
    %v207 = vrot.slane %v154, %v206
    %vm208 = vcmask 130112
    %v209 = vsel %vm208, %v207, %v202
    %v210 = vlaneseq
    %v211 = vshrl.u32 %v210, 7
    %v212 = vsub.s32 %v198, %v211
    %v213 = vrot.slane %v157, %v212
    %v214 = vlaneseq
    %v215 = vshrl.u32 %v214, 7
    %v216 = vsub.s32 %v203, %v215
    %v217 = vrot.slane %v160, %v216
    %v218 = vsel %vm208, %v217, %v213
    %v219 = vlaneseq
    %v220 = vshrl.u32 %v219, 7
    %v221 = vsub.s32 %v198, %v220
    %v222 = vrot.slane %v163, %v221
    %v223 = vlaneseq
    %v224 = vshrl.u32 %v223, 7
    %v225 = vsub.s32 %v203, %v224
    %v226 = vrot.slane %v166, %v225
    %v227 = vsel %vm208, %v226, %v222
    %v228 = vlaneseq
    %v229 = vshrl.u32 %v228, 7
    %v230 = vsub.s32 %v198, %v229
    %v231 = vrot.slane %v169, %v230
    %v232 = vlaneseq
    %v233 = vshrl.u32 %v232, 7
    %v234 = vsub.s32 %v203, %v233
    %v235 = vrot.slane %v172, %v234
    %v236 = vsel %vm208, %v235, %v231
    %v237 = vlaneseq
    %v238 = vshrl.u32 %v237, 7
    %v239 = vsub.s32 %v198, %v238
    %v240 = vrot.slane %v175, %v239
    %v241 = vlaneseq
    %v242 = vshrl.u32 %v241, 7
    %v243 = vsub.s32 %v203, %v242
    %v244 = vrot.slane %v178, %v243
    %v245 = vsel %vm208, %v244, %v240
    %v246 = vlaneseq
    %v247 = vshrl.u32 %v246, 7
    %v248 = vsub.s32 %v198, %v247
    %v249 = vrot.slane %v181, %v248
    %v250 = vlaneseq
    %v251 = vshrl.u32 %v250, 7
    %v252 = vsub.s32 %v203, %v251
    %v253 = vrot.slane %v184, %v252
    %v254 = vsel %vm208, %v253, %v249
    %v255 = vlaneseq
    %v256 = vshrl.u32 %v255, 7
    %v257 = vsub.s32 %v198, %v256
    %v258 = vrot.slane %v187, %v257
    %v259 = vlaneseq
    %v260 = vshrl.u32 %v259, 7
    %v261 = vsub.s32 %v203, %v260
    %v262 = vrot.slane %v190, %v261
    %v263 = vsel %vm208, %v262, %v258
    %v264 = vlaneseq
    %v265 = vshrl.u32 %v264, 7
    %v266 = vsub.s32 %v198, %v265
    %v267 = vrot.slane %v193, %v266
    %v268 = vlaneseq
    %v269 = vshrl.u32 %v268, 7
    %v270 = vsub.s32 %v203, %v269
    %v271 = vrot.slane %v196, %v270
    %v272 = vsel %vm208, %v271, %v267
    %vm273 = vcmask 1041409
    %v274 = vsel %vm273, %v218, %v209
    %vm275 = vcmask 1042434
    %v276 = vsel %vm275, %v227, %v274
    %vm277 = vcmask 1043459
    %v278 = vsel %vm277, %v236, %v276
    %v279 = vsel %vm273, %v254, %v245
    %v280 = vsel %vm275, %v263, %v279
    %v281 = vsel %vm277, %v272, %v280
    %vm284 = vcmask 125952
    %v285 = vsel %vm284, %v278, 0.0
    %286 = vadd.xlane.f32.xlu0 %v285
    %v287 = vpop.xlane.xlu0 %286
    %v288 = vsel %vm284, %v281, 0.0
    %289 = vadd.xlane.f32.xlu0 %v288
    %v290 = vpop.xlane.xlu0 %289
    %v291 = vlaneseq
    %v292 = vshrl.u32 %v291, 7
    %v293 = vsub.s32 4, %v292
    %v294 = vrot.slane %v44, %v293
    %297 = vbcast.lane.b32.xlu0 %v294, 256
    %v298 = vpop.permute.xlu0 %297
    %v300 = vadd.f32 %v287, %v298
    %v301 = vadd.f32 %v290, %v298
    %v302 = vmax.f32 %v300, 0.0
    %v303 = vmax.f32 %v301, 0.0
    %305 = vset.pattern.permute.xlu0 0
    %306 = vperm.xlu0 %305, %v302
    %v307 = vpop.permute.xlu0 %306
    %310 = vset.pattern.permute.xlu0 0
    %311 = vperm.xlu0 %310, %v303
    %v312 = vpop.permute.xlu0 %311
    %vm315 = vcmask 1042432
    %v316 = vrot.slane %v44, 5
    %v317 = vrot.slane %v45, 5
    %v318 = vsel %vm315, %v316, %v317
    %v320 = vmul.f32 %v307, %v318
    %v321 = vmul.f32 %v312, %v318
    %v322 = vsel %vm284, %v320, 0.0
    %v323 = vrot.slane %v322, 4
    %v324 = vadd.f32 %v322, %v323
    %v325 = vrot.slane %v324, 2
    %v326 = vadd.f32 %v324, %v325
    %v327 = vrot.slane %v326, 1
    %v328 = vadd.f32 %v326, %v327
    %v329 = vsel %vm284, %v321, 0.0
    %v330 = vrot.slane %v329, 4
    %v331 = vadd.f32 %v329, %v330
    %v332 = vrot.slane %v331, 2
    %v333 = vadd.f32 %v331, %v332
    %v334 = vrot.slane %v333, 1
    %v335 = vadd.f32 %v333, %v334
    %v336 = vlaneseq
    %v337 = vshrl.u32 %v336, 7
    %v338 = vsub.s32 1, %v337
    %v339 = vrot.slane %v45, %v338
    %v340 = vadd.f32 %v328, %v339
    %v341 = vadd.f32 %v335, %v339
    %v342 = vxor.u32 %v340, 2147483648
    %v343 = vxor.u32 %v341, 2147483648
    %v344 = vmul.f32 %v342, 1.442695
    %v345 = vpow.pop %v344
    %v346 = vmul.f32 %v343, 1.442695
    %v347 = vpow.pop %v346
    %v348 = vadd.f32 %v345, 1.0
    %v349 = vadd.f32 %v347, 1.0
    %v350 = vrcp.pop %v348
    %v351 = vmul.f32 1.0, %v350
    %v352 = vrcp.pop %v349
    %v353 = vmul.f32 1.0, %v352
    %v354 = vlaneseq
    %v355 = vshrl.u32 %v354, 7
    %v356 = vsub.s32 0, %v355
    %v357 = vrot.slane %v351, %v356
    %359 = vbcast.lane.b32.xlu0 %v357, 256
    %v360 = vpop.permute.xlu0 %359
    %s362 = sor.u32 256, 8
    %363 = vbcast.lane.b32.xlu0 %v357, %s362
    %v364 = vpop.permute.xlu0 %363
    %v365 = vlaneseq
    %v366 = vshrl.u32 %v365, 7
    %v367 = vsub.s32 0, %v366
    %v368 = vrot.slane %v353, %v367
    %370 = vbcast.lane.b32.xlu0 %v368, 256
    %v371 = vpop.permute.xlu0 %370
    %s373 = sor.u32 256, 8
    %374 = vbcast.lane.b32.xlu0 %v368, %s373
    %v375 = vpop.permute.xlu0 %374
    %v376 = vmul.f32 %v40, %v360
    %v377 = vmul.f32 %v41, %v364
    %v378 = vmul.f32 %v42, %v371
    %v379 = vmul.f32 %v43, %v375
    %v380 = vcombine.high %v376, 0.0
    %v382 = vunpack.c.l.s4 1983009808
    %v383 = vunpack.c.0.s8 %v382
    %v384 = vlaneseq
    %v385 = vshrl.u32 %v384, 7
    %v386 = vsub.s32 %v383, %v385
    %v387 = vrot.slane %v376, %v386
    %v389 = vunpack.c.l.s4 1983009808
    %v390 = vunpack.c.0.s8 %v389
    %v391 = vlaneseq
    %v392 = vshrl.u32 %v391, 7
    %v393 = vsub.s32 %v390, %v392
    %v394 = vrot.slane %v380, %v393
    %v395 = vcombine.high %v378, 0.0
    %v397 = vunpack.c.l.s4 1983009808
    %v398 = vunpack.c.0.s8 %v397
    %v399 = vlaneseq
    %v400 = vshrl.u32 %v399, 7
    %v401 = vsub.s32 %v398, %v400
    %v402 = vrot.slane %v378, %v401
    %v404 = vunpack.c.l.s4 1983009808
    %v405 = vunpack.c.0.s8 %v404
    %v406 = vlaneseq
    %v407 = vshrl.u32 %v406, 7
    %v408 = vsub.s32 %v405, %v407
    %v409 = vrot.slane %v395, %v408
    %v410 = vcombine.low %v387, %v402
    %v411 = vcombine.high %v387, %v402
    %v413 = vunpack.c.l.s4 1934713408
    %v414 = vunpack.c.0.s8 %v413
    %v415 = vlaneseq
    %v416 = vshrl.u32 %v415, 7
    %v417 = vsub.s32 %v414, %v416
    %v418 = vrot.slane %v410, %v417
    %v420 = vunpack.c.l.s4 1934713408
    %v421 = vunpack.c.0.s8 %v420
    %v422 = vlaneseq
    %v423 = vshrl.u32 %v422, 7
    %v424 = vsub.s32 %v421, %v423
    %v425 = vrot.slane %v411, %v424
    %v426 = vcombine.low %v394, %v409
    %v427 = vcombine.high %v394, %v409
    %v429 = vunpack.c.l.s4 1934713408
    %v430 = vunpack.c.0.s8 %v429
    %v431 = vlaneseq
    %v432 = vshrl.u32 %v431, 7
    %v433 = vsub.s32 %v430, %v432
    %v434 = vrot.slane %v426, %v433
    %v436 = vunpack.c.l.s4 1934713408
    %v437 = vunpack.c.0.s8 %v436
    %v438 = vlaneseq
    %v439 = vshrl.u32 %v438, 7
    %v440 = vsub.s32 %v437, %v439
    %v441 = vrot.slane %v427, %v440
    %v442 = vcombine.high %v418, 0.0
    %v443 = vcombine.high %v425, 0.0
    %v444 = vcombine.high %v434, 0.0
    %v445 = vcombine.high %v441, 0.0
    %v446 = vcombine.high %v377, 0.0
    %v448 = vunpack.c.l.s4 1983009808
    %v449 = vunpack.c.0.s8 %v448
    %v450 = vlaneseq
    %v451 = vshrl.u32 %v450, 7
    %v452 = vsub.s32 %v449, %v451
    %v453 = vrot.slane %v377, %v452
    %v455 = vunpack.c.l.s4 1983009808
    %v456 = vunpack.c.0.s8 %v455
    %v457 = vlaneseq
    %v458 = vshrl.u32 %v457, 7
    %v459 = vsub.s32 %v456, %v458
    %v460 = vrot.slane %v446, %v459
    %v461 = vcombine.high %v379, 0.0
    %v463 = vunpack.c.l.s4 1983009808
    %v464 = vunpack.c.0.s8 %v463
    %v465 = vlaneseq
    %v466 = vshrl.u32 %v465, 7
    %v467 = vsub.s32 %v464, %v466
    %v468 = vrot.slane %v379, %v467
    %v470 = vunpack.c.l.s4 1983009808
    %v471 = vunpack.c.0.s8 %v470
    %v472 = vlaneseq
    %v473 = vshrl.u32 %v472, 7
    %v474 = vsub.s32 %v471, %v473
    %v475 = vrot.slane %v461, %v474
    %v476 = vcombine.low %v453, %v468
    %v477 = vcombine.high %v453, %v468
    %v479 = vunpack.c.l.s4 1934713408
    %v480 = vunpack.c.0.s8 %v479
    %v481 = vlaneseq
    %v482 = vshrl.u32 %v481, 7
    %v483 = vsub.s32 %v480, %v482
    %v484 = vrot.slane %v476, %v483
    %v486 = vunpack.c.l.s4 1934713408
    %v487 = vunpack.c.0.s8 %v486
    %v488 = vlaneseq
    %v489 = vshrl.u32 %v488, 7
    %v490 = vsub.s32 %v487, %v489
    %v491 = vrot.slane %v477, %v490
    %v492 = vcombine.low %v460, %v475
    %v493 = vcombine.high %v460, %v475
    %v495 = vunpack.c.l.s4 1934713408
    %v496 = vunpack.c.0.s8 %v495
    %v497 = vlaneseq
    %v498 = vshrl.u32 %v497, 7
    %v499 = vsub.s32 %v496, %v498
    %v500 = vrot.slane %v492, %v499
    %v502 = vunpack.c.l.s4 1934713408
    %v503 = vunpack.c.0.s8 %v502
    %v504 = vlaneseq
    %v505 = vshrl.u32 %v504, 7
    %v506 = vsub.s32 %v503, %v505
    %v507 = vrot.slane %v493, %v506
    %v508 = vcombine.high %v484, 0.0
    %v509 = vcombine.high %v491, 0.0
    %v510 = vcombine.high %v500, 0.0
    %v511 = vcombine.high %v507, 0.0
    %513 = vrot.lane.b32.xlu0 %v442, 32
    %v514 = vpop.permute.xlu0 %513
    %517 = vrot.lane.b32.xlu0 %v425, 64
    %v518 = vpop.permute.xlu0 %517
    %521 = vrot.lane.b32.xlu0 %v443, 96
    %v522 = vpop.permute.xlu0 %521
    %525 = vrot.lane.b32.xlu0 %v444, 32
    %v526 = vpop.permute.xlu0 %525
    %529 = vrot.lane.b32.xlu0 %v441, 64
    %v530 = vpop.permute.xlu0 %529
    %533 = vrot.lane.b32.xlu0 %v445, 96
    %v534 = vpop.permute.xlu0 %533
    %537 = vrot.lane.b32.xlu0 %v508, 32
    %v538 = vpop.permute.xlu0 %537
    %541 = vrot.lane.b32.xlu0 %v491, 64
    %v542 = vpop.permute.xlu0 %541
    %545 = vrot.lane.b32.xlu0 %v509, 96
    %v546 = vpop.permute.xlu0 %545
    %549 = vrot.lane.b32.xlu0 %v510, 32
    %v550 = vpop.permute.xlu0 %549
    %553 = vrot.lane.b32.xlu0 %v507, 64
    %v554 = vpop.permute.xlu0 %553
    %557 = vrot.lane.b32.xlu0 %v511, 96
    %v558 = vpop.permute.xlu0 %557
    %v560 = vsel %vm46, %v418, %v514
    %vm561 = vcmask 523264
    %v562 = vsel %vm561, %v560, %v518
    %vm563 = vcmask 785408
    %v564 = vsel %vm563, %v562, %v522
    %v565 = vsel %vm46, %v434, %v526
    %v566 = vsel %vm561, %v565, %v530
    %v567 = vsel %vm563, %v566, %v534
    %v568 = vsel %vm46, %v484, %v538
    %v569 = vsel %vm561, %v568, %v542
    %v570 = vsel %vm563, %v569, %v546
    %v571 = vsel %vm46, %v500, %v550
    %v572 = vsel %vm561, %v571, %v554
    %v573 = vsel %vm563, %v572, %v558
    %v578 = vcombine.low %v564, %v567
    %v579 = vcombine.low %v570, %v573
    %v581 = vunpack.c.l.s4 1983009808
    %v582 = vunpack.c.0.s8 %v581
    %v583 = vlaneseq
    %v584 = vshrl.u32 %v583, 7
    %v585 = vsub.s32 %v582, %v584
    %v586 = vrot.slane %v578, %v585
    %v588 = vunpack.c.l.s4 1983009808
    %v589 = vunpack.c.0.s8 %v588
    %v590 = vlaneseq
    %v591 = vshrl.u32 %v590, 7
    %v592 = vsub.s32 %v589, %v591
    %v593 = vrot.slane %v579, %v592
    %v594 = vcombine.low %v586, %v593
    %596 = vst [vmem:[#allocation7] sm:$0xff] %v594
    // Predicated region
    $region18: #{tpu_custom_call.1} parent=1 // pred_check
      _
    $region19: #{tpu_custom_call.1} parent=1 // pred_check_branch
      %598 = sbr.rel (0) target = $region21
    $region20: #{tpu_custom_call.1} parent=1 // pred_region
      %s600 = ssub.s32 128, 128
      %601 = vsyncadd [#allocation4], %s600
      %s603 = sshll.u32 [#allocation7], 4
      %s604 = int_to_ptr.vmem [resolvable:$true] %s603
      %606 = dma.vmem_to_hbm [thread:$0]  %s604, 128, %s2, [#allocation4]
    $region21: #{tpu_custom_call.1} parent=1 // pred_fallthru
      _
    // Predicated region
    $region22: #{tpu_custom_call.1} parent=1 // pred_check
      _
    $region23: #{tpu_custom_call.1} parent=1 // pred_check_branch
      %608 = sbr.rel (0) target = $region25
    $region24: #{tpu_custom_call.1} parent=1 // pred_region
      %609 = dma.done [#allocation4], 128
    $region25: #{tpu_custom_call.1} parent=1 // pred_fallthru
      _
    %610 = vsyncpa [#allocation3], 1
    %611 = vsyncpa [#allocation6], 1
    %612 = vsyncpa [#allocation4], 1

</llo_original>
